<compile_context>
chip_gen: v5e
topology: v5e:2x2
jax: 0.10.0
libtpu: 0.0.40
codegen_flags: <defaults>
</compile_context>

<pallas_src>
import functools
from typing import NamedTuple

import jax
import jax.numpy as jnp
from jax.experimental import pallas as pl
from jax.experimental.pallas import tpu as pltpu


def _round_up(n, m):
    return ((n + m - 1) // m) * m


def _cdiv(a, b):
    return (a + b - 1) // b


# ---------------------------------------------------------------------------
# Hardware introspection (cached, evaluated once).
# ---------------------------------------------------------------------------
@functools.lru_cache(maxsize=None)
def _tpu_info():
    """Returns (tensorcores_per_device, vmem_capacity_bytes) with safe fallbacks."""
    cores, vmem = 1, 64 << 20  # conservative defaults (v7x per-TC VMEM)
    try:
        dev = jax.devices()[0]
        if dev.platform != "tpu":
            return cores, vmem
        kind = (getattr(dev, "device_kind", "") or "").lower()
        # v4 / v5p (megacore) and v7x expose 2 TensorCores per device that a
        # "parallel" grid axis can shard across.
        if ("v4" in kind) or ("v5p" in kind) or ("v7" in kind):
            cores = 2
        if "v7" not in kind:
            vmem = 128 << 20  # v2..v6 TensorCores: 128 MiB VMEM
        try:
            info = pltpu.get_tpu_info()
            cap = int(getattr(info, "vmem_capacity_bytes", 0) or 0)
            if cap > 0:
                vmem = cap
        except Exception:
            pass
    except Exception:
        pass
    return cores, vmem


@functools.lru_cache(maxsize=None)
def _supports_single_buffered_blockspec():
    """One-time capability probe: does this Pallas build accept
    BlockSpec(pipeline_mode=pl.Buffered(1))?  Only called when the weights are
    large enough for single-buffering to matter, so failures here never mask
    errors in the real kernel."""
    try:
        def _copy(x_ref, o_ref):
            o_ref[...] = x_ref[...]

        fn = pl.pallas_call(
            _copy,
            out_shape=jax.ShapeDtypeStruct((8, 128), jnp.float32),
            grid=(1,),
            in_specs=[pl.BlockSpec((8, 128), lambda i: (0, 0),
                                   pipeline_mode=pl.Buffered(1))],
            out_specs=pl.BlockSpec((8, 128), lambda i: (0, 0)),
        )
        jax.jit(fn).lower(jnp.zeros((8, 128), jnp.float32)).compile()
        return True
    except Exception:
        return False


# ---------------------------------------------------------------------------
# One-time weight packing (call once, reuse across forwards).
# ---------------------------------------------------------------------------
class PackedFCParams(NamedTuple):
    w1l: jax.Array   # (in_dim, 2*out_p) compute dtype: [W1 | Wl] fused
    b1l: jax.Array   # (1, 2*out_p) f32:                [b1 | bl]
    w2: jax.Array    # (out_p, out_p) compute dtype
    b2: jax.Array    # (1, out_p) f32
    w3: jax.Array    # (out_p, out_p) compute dtype
    b3: jax.Array    # (1, out_p) f32
    out_dim: int     # original (unpadded) output width


def pack_params(w1, b1, w2, b2, w3, b3, wl, bl, *, compute_dtype=jnp.bfloat16):
    """Pad output features to a lane-dense multiple of 128, fuse the layer-1
    and skip weights into one slab (they share x as the MXU LHS), and cast
    weights to the compute dtype (biases stay f32).  The contraction (K) dims
    are left unpadded so x never needs to be repacked."""
    in_dim, out_dim = w1.shape
    out_p = _round_up(out_dim, 128)

    def pad_cols(a, cols):
        return jnp.pad(a, ((0, 0), (0, cols - a.shape[1])))

    w1l = jnp.concatenate([pad_cols(w1, out_p), pad_cols(wl, out_p)],
                          axis=1).astype(compute_dtype)
    b1l = jnp.concatenate([pad_cols(b1, out_p), pad_cols(bl, out_p)],
                          axis=1).astype(jnp.float32)
    w2_p = jnp.pad(w2, ((0, out_p - out_dim), (0, out_p - out_dim))).astype(compute_dtype)
    w3_p = jnp.pad(w3, ((0, out_p - out_dim), (0, out_p - out_dim))).astype(compute_dtype)
    b2_p = pad_cols(b2, out_p).astype(jnp.float32)
    b3_p = pad_cols(b3, out_p).astype(jnp.float32)
    return PackedFCParams(w1l, b1l, w2_p, b2_p, w3_p, b3_p, out_dim)


# ---------------------------------------------------------------------------
# Kernel
# ---------------------------------------------------------------------------
def fc_kernel(x_ref, w1l_ref, b1l_ref, w2_ref, b2_ref, w3_ref, b3_ref, o_ref):
    """One batch tile of: ReLU-MLP3(x) + Linear_skip(x).

    Layer 1 and the skip Linear share x as LHS, so their weights arrive fused
    as one (in_dim, 2*out_p) slab -> a single MXU weight-load phase.  The skip
    half is parked in the resident output block immediately so its f32 slab is
    not held live in the vreg file while layers 2/3 run (cuts spill traffic,
    most valuable on v5e's single vector-store slot).
    """
    n = w2_ref.shape[1]                                  # padded output width
    x = x_ref[...].astype(w1l_ref.dtype)                 # f32 -> compute dtype (VPU)

    h1l = jnp.dot(x, w1l_ref[...],
                  preferred_element_type=jnp.float32) + b1l_ref[...]
    o_ref[...] = h1l[:, n:].astype(o_ref.dtype)          # skip branch -> output VMEM
    h = jnp.maximum(h1l[:, :n], 0.0).astype(w2_ref.dtype)

    h = jnp.dot(h, w2_ref[...],
                preferred_element_type=jnp.float32) + b2_ref[...]
    h = jnp.maximum(h, 0.0).astype(w3_ref.dtype)

    h = jnp.dot(h, w3_ref[...],
                preferred_element_type=jnp.float32) + b3_ref[...]
    h = jnp.maximum(h, 0.0)

    o_ref[...] = (h + o_ref[...].astype(jnp.float32)).astype(o_ref.dtype)


@functools.partial(
    jax.jit,
    static_argnames=("tm", "out_dim", "out_dtype", "single_buffer", "vmem_limit"))
def _fc_forward_impl(x, w1l, b1l, w2, b2, w3, b3, *, tm, out_dim, out_dtype,
                     single_buffer, vmem_limit):
    B, in_dim = x.shape
    out_p = w2.shape[1]

    # Batch rows are only padded when B is not already tile-aligned.
    B_p = _round_up(B, tm)
    if B_p != B:
        x = jnp.pad(x, ((0, B_p - B), (0, 0)))
    grid = (B_p // tm,)

    # Constant-index weight/bias blocks: optionally single-buffered to halve
    # their resident VMEM (only requested when the capability probe passed).
    wspec_kwargs = dict(pipeline_mode=pl.Buffered(1)) if single_buffer else {}

    def wspec(shape):
        return pl.BlockSpec(shape, lambda i: (0, 0), **wspec_kwargs)

    cbytes = w1l.dtype.itemsize
    obytes = jnp.dtype(out_dtype).itemsize
    flops = 2 * B_p * (in_dim * 2 * out_p + 2 * out_p * out_p)
    bytes_accessed = (B_p * in_dim * 4 + B_p * out_p * obytes
                      + (in_dim * 2 * out_p + 2 * out_p * out_p) * cbytes
                      + 4 * out_p * 4)

    out = pl.pallas_call(
        fc_kernel,
        out_shape=jax.ShapeDtypeStruct((B_p, out_p), out_dtype),
        grid_spec=pltpu.PrefetchScalarGridSpec(
            num_scalar_prefetch=0,
            grid=grid,
            in_specs=[
                pl.BlockSpec((tm, in_dim), lambda i: (i, 0)),   # x batch tile (f32)
                wspec((in_dim, 2 * out_p)),                     # [W1 | Wl]
                wspec((1, 2 * out_p)),                          # [b1 | bl]
                wspec((out_p, out_p)),                          # W2
                wspec((1, out_p)),                              # b2
                wspec((out_p, out_p)),                          # W3
                wspec((1, out_p)),                              # b3
            ],
            out_specs=pl.BlockSpec((tm, out_p), lambda i: (i, 0)),
        ),
        compiler_params=pltpu.CompilerParams(
            dimension_semantics=("parallel",),
            vmem_limit_bytes=vmem_limit),
        cost_estimate=pl.CostEstimate(
            flops=flops, transcendentals=0, bytes_accessed=bytes_accessed),
    )(x, w1l, b1l, w2, b2, w3, b3)

    return out[:B, :out_dim]


def fc_forward(x, params: PackedFCParams, *, out_dtype=jnp.float32, tm_target=512):
    """Forward pass of FC with pre-packed weights.  f32 x in -> out_dtype out."""
    B, in_dim = x.shape
    assert in_dim == params.w1l.shape[0], "x feature dim does not match packed params"
    out_p = params.w2.shape[1]
    cores, vmem_cap = _tpu_info()

    # Batch tile: multiple of 16 (bf16 sublane packing of intermediates), as
    # large as tm_target to amortize the ~0.35us per-grid-step overhead, and
    # split across TensorCores only when the device actually has more than one.
    tm = min(tm_target, _round_up(B, 16))
    if cores > 1 and B > 16:
        tm = min(tm, _round_up(_cdiv(B, cores), 16))
    tm = max(tm, 16)

    # Derived VMEM budget: resident weights (+/- single buffering) +
    # double-buffered x/out tiles + f32 intermediates, never asking for more
    # than ~3/4 of the device's physical VMEM.
    cbytes = params.w1l.dtype.itemsize
    w_bytes = (params.w1l.size + params.w2.size + params.w3.size) * cbytes
    b_bytes = (params.b1l.size + params.b2.size + params.b3.size) * 4
    single_buffer = (w_bytes > (4 << 20)) and _supports_single_buffered_blockspec()
    w_resident = (w_bytes + b_bytes) * (1 if single_buffer else 2)
    tile_bytes = 2 * tm * in_dim * 4 + 2 * tm * out_p * jnp.dtype(out_dtype).itemsize
    interm_bytes = 3 * tm * 2 * out_p * 4
    needed = w_resident + tile_bytes + interm_bytes
    vmem_limit = int(min(max(needed * 5 // 4, 32 << 20), vmem_cap * 3 // 4))

    if needed > vmem_cap * 3 // 4:
        # TODO(synk): add an out_p/in_dim-tiled grid for very large feature
        # dims; until then fall back to plain XLA so huge configs stay usable.
        xc = x.astype(params.w1l.dtype)
        h1l = jnp.dot(xc, params.w1l, preferred_element_type=jnp.float32) + params.b1l
        skip = h1l[:, out_p:]
        h = jnp.maximum(h1l[:, :out_p], 0.0).astype(params.w2.dtype)
        h = jnp.maximum(jnp.dot(h, params.w2, preferred_element_type=jnp.float32)
                        + params.b2, 0.0).astype(params.w3.dtype)
        h = jnp.maximum(jnp.dot(h, params.w3, preferred_element_type=jnp.float32)
                        + params.b3, 0.0)
        return ((h + skip)[:, :params.out_dim]).astype(out_dtype)

    return _fc_forward_impl(
        x, params.w1l, params.b1l, params.w2, params.b2, params.w3, params.b3,
        tm=tm, out_dim=params.out_dim, out_dtype=out_dtype,
        single_buffer=single_buffer, vmem_limit=vmem_limit)


# ---------------------------------------------------------------------------
# Reference / demo
# ---------------------------------------------------------------------------
def init_params(key, input_dim, output_dim):
    ks = jax.random.split(key, 8)
    s_in = 1.0 / jnp.sqrt(input_dim)
    s_out = 1.0 / jnp.sqrt(output_dim)
    w1 = jax.random.uniform(ks[0], (input_dim, output_dim), jnp.float32, -s_in, s_in)
    b1 = jax.random.uniform(ks[1], (1, output_dim), jnp.float32, -s_in, s_in)
    w2 = jax.random.uniform(ks[2], (output_dim, output_dim), jnp.float32, -s_out, s_out)
    b2 = jax.random.uniform(ks[3], (1, output_dim), jnp.float32, -s_out, s_out)
    w3 = jax.random.uniform(ks[4], (output_dim, output_dim), jnp.float32, -s_out, s_out)
    b3 = jax.random.uniform(ks[5], (1, output_dim), jnp.float32, -s_out, s_out)
    wl = jax.random.uniform(ks[6], (input_dim, output_dim), jnp.float32, -s_in, s_in)
    bl = jax.random.uniform(ks[7], (1, output_dim), jnp.float32, -s_in, s_in)
    return w1, b1, w2, b2, w3, b3, wl, bl


def fc_reference(x, w1, b1, w2, b2, w3, b3, wl, bl):
    h = jnp.maximum(x @ w1 + b1, 0.0)
    h = jnp.maximum(h @ w2 + b2, 0.0)
    h = jnp.maximum(h @ w3 + b3, 0.0)
    return h + (x @ wl + bl)


if __name__ == "__main__":
    key = jax.random.PRNGKey(0)
    k_x, k_x2, k_p = jax.random.split(key, 3)

    # Small, deliberately non-128-aligned dims to exercise the padding/packing.
    input_dim, output_dim = 96, 64
    raw = init_params(k_p, input_dim, output_dim)
    packed = pack_params(*raw)                     # one-time weight preparation

    # Case 1: tile-aligned batch (no wrapper copy of x at all).
    B1 = 256
    x1 = jax.random.normal(k_x, (B1, input_dim), jnp.float32)
    out1 = jax.block_until_ready(fc_forward(x1, packed))
    ref1 = fc_reference(x1, *raw)
    assert out1.shape == (B1, output_dim)
    err1 = float(jnp.max(jnp.abs(out1 - ref1)))
    assert jnp.allclose(out1, ref1, atol=5e-2, rtol=5e-2), f"max_err={err1}"

    # Case 2: ragged batch (exercises the batch-padding path).
    B2 = 100
    x2 = jax.random.normal(k_x2, (B2, input_dim), jnp.float32)
    out2 = jax.block_until_ready(fc_forward(x2, packed))
    ref2 = fc_reference(x2, *raw)
    assert out2.shape == (B2, output_dim)
    err2 = float(jnp.max(jnp.abs(out2 - ref2)))
    assert jnp.allclose(out2, ref2, atol=5e-2, rtol=5e-2), f"max_err={err2}"

    print("KERNEL_OK")
</pallas_src>

<mosaic_0001>
module attributes {stable_mosaic.version = 11 : i64} {
  func.func @fc_kernel(%arg0: i32, %arg1: memref<256x96xf32, #tpu.memory_space<vmem>>, %arg2: memref<96x256xbf16, #tpu.memory_space<vmem>>, %arg3: memref<1x256xf32, #tpu.memory_space<vmem>>, %arg4: memref<128x128xbf16, #tpu.memory_space<vmem>>, %arg5: memref<1x128xf32, #tpu.memory_space<vmem>>, %arg6: memref<128x128xbf16, #tpu.memory_space<vmem>>, %arg7: memref<1x128xf32, #tpu.memory_space<vmem>>, %arg8: memref<256x128xf32, #tpu.memory_space<vmem>>) attributes {dimension_semantics = [#tpu.dimension_semantics<parallel>], iteration_bounds = array<i64: 1>, scalar_prefetch = 0 : i64, scratch_operands = 0 : i64, tpu.core_type = #tpu.core_type<tc>, window_params = [{transform_indices = @transform_0, window_bounds = array<i64: 256, 96>}, {pipeline_mode = #tpu.pipeline_mode<synchronous>, transform_indices = @transform_1, window_bounds = array<i64: 96, 256>}, {pipeline_mode = #tpu.pipeline_mode<synchronous>, transform_indices = @transform_2, window_bounds = array<i64: 1, 256>}, {pipeline_mode = #tpu.pipeline_mode<synchronous>, transform_indices = @transform_3, window_bounds = array<i64: 128, 128>}, {pipeline_mode = #tpu.pipeline_mode<synchronous>, transform_indices = @transform_4, window_bounds = array<i64: 1, 128>}, {pipeline_mode = #tpu.pipeline_mode<synchronous>, transform_indices = @transform_5, window_bounds = array<i64: 128, 128>}, {pipeline_mode = #tpu.pipeline_mode<synchronous>, transform_indices = @transform_6, window_bounds = array<i64: 1, 128>}, {transform_indices = @transform_7, window_bounds = array<i64: 256, 128>}]} {
    %c0 = arith.constant 0 : index
    %c0_0 = arith.constant 0 : index
    %0 = vector.load %arg1[%c0, %c0_0] : memref<256x96xf32, #tpu.memory_space<vmem>>, vector<256x96xf32>
    %1 = arith.truncf %0 : vector<256x96xf32> to vector<256x96xbf16>
    %c0_1 = arith.constant 0 : index
    %c0_2 = arith.constant 0 : index
    %2 = vector.load %arg2[%c0_1, %c0_2] : memref<96x256xbf16, #tpu.memory_space<vmem>>, vector<96x256xbf16>
    %cst = arith.constant dense<0.000000e+00> : vector<256x256xf32>
    %3 = tpu.matmul %1, %2, %cst {dimension_numbers = #tpu.dot_dimension_numbers<[1], [0], [0], [1], [0, 0, 1, 1], [], []>} : vector<256x96xbf16>, vector<96x256xbf16>, vector<256x256xf32> -> vector<256x256xf32>
    %c0_3 = arith.constant 0 : index
    %c0_4 = arith.constant 0 : index
    %4 = vector.load %arg3[%c0_3, %c0_4] : memref<1x256xf32, #tpu.memory_space<vmem>>, vector<1x256xf32>
    %5 = vector.broadcast %4 : vector<1x256xf32> to vector<256x256xf32>
    %6 = arith.addf %3, %5 : vector<256x256xf32>
    %7 = vector.extract_strided_slice %6 {offsets = [0, 128], sizes = [256, 128], strides = [1, 1]} : vector<256x256xf32> to vector<256x128xf32>
    %c0_5 = arith.constant 0 : index
    %c0_6 = arith.constant 0 : index
    %8 = vector.load %arg8[%c0_5, %c0_6] : memref<256x128xf32, #tpu.memory_space<vmem>>, vector<256x128xf32>
    tpu.vector_store %arg8[%c0_5, %c0_6], %7 {strides = array<i32>} : memref<256x128xf32, #tpu.memory_space<vmem>>, vector<256x128xf32>,
    %9 = vector.extract_strided_slice %6 {offsets = [0, 0], sizes = [256, 128], strides = [1, 1]} : vector<256x256xf32> to vector<256x128xf32>
    %cst_7 = arith.constant 0.000000e+00 : f32
    %10 = vector.broadcast %cst_7 : f32 to vector<256x128xf32>
    %11 = arith.maximumf %9, %10 : vector<256x128xf32>
    %12 = arith.truncf %11 : vector<256x128xf32> to vector<256x128xbf16>
    %c0_8 = arith.constant 0 : index
    %c0_9 = arith.constant 0 : index
    %13 = vector.load %arg4[%c0_8, %c0_9] : memref<128x128xbf16, #tpu.memory_space<vmem>>, vector<128x128xbf16>
    %cst_10 = arith.constant dense<0.000000e+00> : vector<256x128xf32>
    %14 = tpu.matmul %12, %13, %cst_10 {dimension_numbers = #tpu.dot_dimension_numbers<[1], [0], [0], [1], [0, 0, 1, 1], [], []>} : vector<256x128xbf16>, vector<128x128xbf16>, vector<256x128xf32> -> vector<256x128xf32>
    %c0_11 = arith.constant 0 : index
    %c0_12 = arith.constant 0 : index
    %15 = vector.load %arg5[%c0_11, %c0_12] : memref<1x128xf32, #tpu.memory_space<vmem>>, vector<1x128xf32>
    %16 = vector.broadcast %15 : vector<1x128xf32> to vector<256x128xf32>
    %17 = arith.addf %14, %16 : vector<256x128xf32>
    %cst_13 = arith.constant 0.000000e+00 : f32
    %18 = vector.broadcast %cst_13 : f32 to vector<256x128xf32>
    %19 = arith.maximumf %17, %18 : vector<256x128xf32>
    %20 = arith.truncf %19 : vector<256x128xf32> to vector<256x128xbf16>
    %c0_14 = arith.constant 0 : index
    %c0_15 = arith.constant 0 : index
    %21 = vector.load %arg6[%c0_14, %c0_15] : memref<128x128xbf16, #tpu.memory_space<vmem>>, vector<128x128xbf16>
    %cst_16 = arith.constant dense<0.000000e+00> : vector<256x128xf32>
    %22 = tpu.matmul %20, %21, %cst_16 {dimension_numbers = #tpu.dot_dimension_numbers<[1], [0], [0], [1], [0, 0, 1, 1], [], []>} : vector<256x128xbf16>, vector<128x128xbf16>, vector<256x128xf32> -> vector<256x128xf32>
    %c0_17 = arith.constant 0 : index
    %c0_18 = arith.constant 0 : index
    %23 = vector.load %arg7[%c0_17, %c0_18] : memref<1x128xf32, #tpu.memory_space<vmem>>, vector<1x128xf32>
    %24 = vector.broadcast %23 : vector<1x128xf32> to vector<256x128xf32>
    %25 = arith.addf %22, %24 : vector<256x128xf32>
    %cst_19 = arith.constant 0.000000e+00 : f32
    %26 = vector.broadcast %cst_19 : f32 to vector<256x128xf32>
    %27 = arith.maximumf %25, %26 : vector<256x128xf32>
    %c0_20 = arith.constant 0 : index
    %c0_21 = arith.constant 0 : index
    %28 = vector.load %arg8[%c0_20, %c0_21] : memref<256x128xf32, #tpu.memory_space<vmem>>, vector<256x128xf32>
    %29 = arith.addf %27, %28 : vector<256x128xf32>
    %c0_22 = arith.constant 0 : index
    %c0_23 = arith.constant 0 : index
    %30 = vector.load %arg8[%c0_22, %c0_23] : memref<256x128xf32, #tpu.memory_space<vmem>>, vector<256x128xf32>
    tpu.vector_store %arg8[%c0_22, %c0_23], %29 {strides = array<i32>} : memref<256x128xf32, #tpu.memory_space<vmem>>, vector<256x128xf32>,
    return
  }
  func.func @transform_0(%arg0: i32) -> (i32, i32) {
    %c0_i32 = arith.constant 0 : i32
    %c0_i32_0 = arith.constant 0 : i32
    return %arg0, %c0_i32 : i32, i32
  }
  func.func @transform_1(%arg0: i32) -> (i32, i32) {
    %c0_i32 = arith.constant 0 : i32
    %c0_i32_0 = arith.constant 0 : i32
    %c0_i32_1 = arith.constant 0 : i32
    return %c0_i32, %c0_i32_0 : i32, i32
  }
  func.func @transform_2(%arg0: i32) -> (i32, i32) {
    %c0_i32 = arith.constant 0 : i32
    %c0_i32_0 = arith.constant 0 : i32
    %c0_i32_1 = arith.constant 0 : i32
    return %c0_i32, %c0_i32_0 : i32, i32
  }
  func.func @transform_3(%arg0: i32) -> (i32, i32) {
    %c0_i32 = arith.constant 0 : i32
    %c0_i32_0 = arith.constant 0 : i32
    %c0_i32_1 = arith.constant 0 : i32
    return %c0_i32, %c0_i32_0 : i32, i32
  }
  func.func @transform_4(%arg0: i32) -> (i32, i32) {
    %c0_i32 = arith.constant 0 : i32
    %c0_i32_0 = arith.constant 0 : i32
    %c0_i32_1 = arith.constant 0 : i32
    return %c0_i32, %c0_i32_0 : i32, i32
  }
  func.func @transform_5(%arg0: i32) -> (i32, i32) {
    %c0_i32 = arith.constant 0 : i32
    %c0_i32_0 = arith.constant 0 : i32
    %c0_i32_1 = arith.constant 0 : i32
    return %c0_i32, %c0_i32_0 : i32, i32
  }
  func.func @transform_6(%arg0: i32) -> (i32, i32) {
    %c0_i32 = arith.constant 0 : i32
    %c0_i32_0 = arith.constant 0 : i32
    %c0_i32_1 = arith.constant 0 : i32
    return %c0_i32, %c0_i32_0 : i32, i32
  }
  func.func @transform_7(%arg0: i32) -> (i32, i32) {
    %c0_i32 = arith.constant 0 : i32
    %c0_i32_0 = arith.constant 0 : i32
    return %arg0, %c0_i32 : i32, i32
  }
}

</mosaic_0001>

<llo_original>
// kernel: _fc_forward_impl.1
$region0: #{_fc_forward_impl.1}
  #allocation0 [shape = 'u32[]', space=smem, size = 0x4, offset = 0x4, fixed_abs, tag = 'smem constant byte address 0x4 - core index']
  #allocation1 [shape = 'u32[72,128]{1,0:T(1,128)}', space=vmem, size = 0x9000, scoped, tag = 'internal scratch']
  %s0 = inlined_call_operand.vmem [shape: f32[256,96], index: 0, kind: input, shape index: {}]
  %s1 = inlined_call_operand.vmem [shape: bf16[96,256], index: 1, kind: input, shape index: {}]
  %s2 = inlined_call_operand.vmem [shape: f32[1,256], index: 2, kind: input, shape index: {}]
  %s3 = inlined_call_operand.vmem [shape: bf16[128,128], index: 3, kind: input, shape index: {}]
  %s4 = inlined_call_operand.vmem [shape: f32[1,128], index: 4, kind: input, shape index: {}]
  %s5 = inlined_call_operand.vmem [shape: bf16[128,128], index: 5, kind: input, shape index: {}]
  %s6 = inlined_call_operand.vmem [shape: f32[1,128], index: 6, kind: input, shape index: {}]
  %s7 = inlined_call_operand.vmem [shape: f32[256,128], index: 7, kind: output, shape index: {}]
  %s8 = sld [smem:[#allocation0]]
  $region38: #{_fc_forward_impl.1} parent=0
    _
  %s10 = ssub.s32 1, %s8
  %s11 = scalar_select 0, %s10, %s8
  // Predicated region
  $region2: #{_fc_forward_impl.1} parent=0 // pred_check
    _
  $region3: #{_fc_forward_impl.1} parent=0 // pred_check_branch
    %13 = sbr.rel (0) target = $region5
  $region4: #{_fc_forward_impl.1} parent=0 // pred_region
    _
  $region5: #{_fc_forward_impl.1} parent=0 // pred_fallthru
    _
  // Predicated region
  $region6: #{_fc_forward_impl.1} parent=0 // pred_check
    _
  $region7: #{_fc_forward_impl.1} parent=0 // pred_check_branch
    %15 = sbr.rel (0) target = $region9
  $region8: #{_fc_forward_impl.1} parent=0 // pred_region
    _
  $region9: #{_fc_forward_impl.1} parent=0 // pred_fallthru
    _
  // Predicated region
  $region10: #{_fc_forward_impl.1} parent=0 // pred_check
    _
  $region11: #{_fc_forward_impl.1} parent=0 // pred_check_branch
    %17 = sbr.rel (0) target = $region13
  $region12: #{_fc_forward_impl.1} parent=0 // pred_region
    _
  $region13: #{_fc_forward_impl.1} parent=0 // pred_fallthru
    _
  // Predicated region
  $region14: #{_fc_forward_impl.1} parent=0 // pred_check
    _
  $region15: #{_fc_forward_impl.1} parent=0 // pred_check_branch
    %19 = sbr.rel (0) target = $region17
  $region16: #{_fc_forward_impl.1} parent=0 // pred_region
    _
  $region17: #{_fc_forward_impl.1} parent=0 // pred_fallthru
    _
  // Predicated region
  $region18: #{_fc_forward_impl.1} parent=0 // pred_check
    _
  $region19: #{_fc_forward_impl.1} parent=0 // pred_check_branch
    %21 = sbr.rel (0) target = $region21
  $region20: #{_fc_forward_impl.1} parent=0 // pred_region
    _
  $region21: #{_fc_forward_impl.1} parent=0 // pred_fallthru
    _
  // Predicated region
  $region22: #{_fc_forward_impl.1} parent=0 // pred_check
    _
  $region23: #{_fc_forward_impl.1} parent=0 // pred_check_branch
    %23 = sbr.rel (0) target = $region25
  $region24: #{_fc_forward_impl.1} parent=0 // pred_region
    _
  $region25: #{_fc_forward_impl.1} parent=0 // pred_fallthru
    _
  // Predicated region
  $region26: #{_fc_forward_impl.1} parent=0 // pred_check
    _
  $region27: #{_fc_forward_impl.1} parent=0 // pred_check_branch
    %25 = sbr.rel (0) target = $region29
  $region28: #{_fc_forward_impl.1} parent=0 // pred_region
    _
  $region29: #{_fc_forward_impl.1} parent=0 // pred_fallthru
    _
  %v27 = vld [vmem:[%s0] sm:$0xff]
  %v28 = vld [vmem:[%s0 + $0x8] sm:$0xff]
  %v29 = vld [vmem:[%s0 + $0x10] sm:$0xff]
  %v30 = vld [vmem:[%s0 + $0x18] sm:$0xff]
  %v31 = vld [vmem:[%s0 + $0x20] sm:$0xff]
  %v32 = vld [vmem:[%s0 + $0x28] sm:$0xff]
  %v33 = vld [vmem:[%s0 + $0x30] sm:$0xff]
  %v34 = vld [vmem:[%s0 + $0x38] sm:$0xff]
  %v35 = vld [vmem:[%s0 + $0x40] sm:$0xff]
  %v36 = vld [vmem:[%s0 + $0x48] sm:$0xff]
  %v37 = vld [vmem:[%s0 + $0x50] sm:$0xff]
  %v38 = vld [vmem:[%s0 + $0x58] sm:$0xff]
  %v39 = vld [vmem:[%s0 + $0x60] sm:$0xff]
  %v40 = vld [vmem:[%s0 + $0x68] sm:$0xff]
  %v41 = vld [vmem:[%s0 + $0x70] sm:$0xff]
  %v42 = vld [vmem:[%s0 + $0x78] sm:$0xff]
  %v43 = vld [vmem:[%s0 + $0x80] sm:$0xff]
  %v44 = vld [vmem:[%s0 + $0x88] sm:$0xff]
  %v45 = vld [vmem:[%s0 + $0x90] sm:$0xff]
  %v46 = vld [vmem:[%s0 + $0x98] sm:$0xff]
  %v47 = vld [vmem:[%s0 + $0xa0] sm:$0xff]
  %v48 = vld [vmem:[%s0 + $0xa8] sm:$0xff]
  %v49 = vld [vmem:[%s0 + $0xb0] sm:$0xff]
  %v50 = vld [vmem:[%s0 + $0xb8] sm:$0xff]
  %v51 = vld [vmem:[%s0 + $0xc0] sm:$0xff]
  %v52 = vld [vmem:[%s0 + $0xc8] sm:$0xff]
  %v53 = vld [vmem:[%s0 + $0xd0] sm:$0xff]
  %v54 = vld [vmem:[%s0 + $0xd8] sm:$0xff]
  %v55 = vld [vmem:[%s0 + $0xe0] sm:$0xff]
  %v56 = vld [vmem:[%s0 + $0xe8] sm:$0xff]
  %v57 = vld [vmem:[%s0 + $0xf0] sm:$0xff]
  %v58 = vld [vmem:[%s0 + $0xf8] sm:$0xff]
  %v59 = vpack.c.bf16 %v28, %v27
  %v60 = vpack.c.bf16 %v30, %v29
  %v61 = vpack.c.bf16 %v32, %v31
  %v62 = vpack.c.bf16 %v34, %v33
  %v63 = vpack.c.bf16 %v36, %v35
  %v64 = vpack.c.bf16 %v38, %v37
  %v65 = vpack.c.bf16 %v40, %v39
  %v66 = vpack.c.bf16 %v42, %v41
  %v67 = vpack.c.bf16 %v44, %v43
  %v68 = vpack.c.bf16 %v46, %v45
  %v69 = vpack.c.bf16 %v48, %v47
  %v70 = vpack.c.bf16 %v50, %v49
  %v71 = vpack.c.bf16 %v52, %v51
  %v72 = vpack.c.bf16 %v54, %v53
  %v73 = vpack.c.bf16 %v56, %v55
  %v74 = vpack.c.bf16 %v58, %v57
  %v75 = vld [vmem:[%s1] sm:$0xff]
  %v76 = vld [vmem:[%s1 + $0x8] sm:$0xff]
  %v77 = vld [vmem:[%s1 + $0x10] sm:$0xff]
  %v78 = vld [vmem:[%s1 + $0x18] sm:$0xff]
  %v79 = vld [vmem:[%s1 + $0x20] sm:$0xff]
  %v80 = vld [vmem:[%s1 + $0x28] sm:$0xff]
  %v81 = vld [vmem:[%s1 + $0x30] sm:$0xff]
  %v82 = vld [vmem:[%s1 + $0x38] sm:$0xff]
  %v83 = vld [vmem:[%s1 + $0x40] sm:$0xff]
  %v84 = vld [vmem:[%s1 + $0x48] sm:$0xff]
  %v85 = vld [vmem:[%s1 + $0x50] sm:$0xff]
  %v86 = vld [vmem:[%s1 + $0x58] sm:$0xff]
  %v87 = vld [vmem:[%s2] sm:$0x3]
  %v89 = vperm.slane %v87, 0
  %v90 = vperm.slane %v87, 1
  %v105 = vunpack.c.l.b16 %v75
  %v106 = vunpack.c.h.b16 %v75
  %v107 = vunpack.c.l.b16 %v76
  %v108 = vunpack.c.h.b16 %v76
  %v109 = vunpack.c.l.b16 %v77
  %v110 = vunpack.c.h.b16 %v77
  %v111 = vunpack.c.l.b16 %v78
  %v112 = vunpack.c.h.b16 %v78
  %v113 = vunpack.c.l.b16 %v79
  %v114 = vunpack.c.h.b16 %v79
  %v115 = vunpack.c.l.b16 %v80
  %v116 = vunpack.c.h.b16 %v80
  %v117 = vunpack.c.l.b16 %v81
  %v118 = vunpack.c.h.b16 %v81
  %v119 = vunpack.c.l.b16 %v82
  %v120 = vunpack.c.h.b16 %v82
  %v121 = vunpack.c.l.b16 %v83
  %v122 = vunpack.c.h.b16 %v83
  %v123 = vunpack.c.l.b16 %v84
  %v124 = vunpack.c.h.b16 %v84
  %v125 = vunpack.c.l.b16 %v85
  %v126 = vunpack.c.h.b16 %v85
  %v127 = vunpack.c.l.b16 %v86
  %v128 = vunpack.c.h.b16 %v86
  %v129 = vpack.c.b16 %v107, %v105
  %v130 = vpack.c.b16 %v108, %v106
  %v131 = vpack.c.b16 %v111, %v109
  %v132 = vpack.c.b16 %v112, %v110
  %v133 = vpack.c.b16 %v115, %v113
  %v134 = vpack.c.b16 %v116, %v114
  %v135 = vpack.c.b16 %v119, %v117
  %v136 = vpack.c.b16 %v120, %v118
  %v137 = vpack.c.b16 %v123, %v121
  %v138 = vpack.c.b16 %v124, %v122
  %v139 = vpack.c.b16 %v127, %v125
  %v140 = vpack.c.b16 %v128, %v126
  %vm153 = vcmask 785408
  %v155 = vsel %vm153, %v59, 0
  %v158 = vsel %vm153, %v60, 0
  %v161 = vsel %vm153, %v61, 0
  %v164 = vsel %vm153, %v62, 0
  %v167 = vsel %vm153, %v63, 0
  %v170 = vsel %vm153, %v64, 0
  %v173 = vsel %vm153, %v65, 0
  %v176 = vsel %vm153, %v66, 0
  %v179 = vsel %vm153, %v67, 0
  %v182 = vsel %vm153, %v68, 0
  %v185 = vsel %vm153, %v69, 0
  %v188 = vsel %vm153, %v70, 0
  %v191 = vsel %vm153, %v71, 0
  %v194 = vsel %vm153, %v72, 0
  %v197 = vsel %vm153, %v73, 0
  %v200 = vsel %vm153, %v74, 0
  %202 = vmatpush.bf16.msra.mxu0 0
  %203 = vmatpush.bf16.msra.mxu0 0
  %204 = vmatpush.bf16.msra.mxu0 %v139
  %205 = vmatpush.bf16.msra.mxu0 %v137
  %206 = vmatpush.bf16.msra.mxu0 %v135
  %207 = vmatpush.bf16.msra.mxu0 %v133
  %208 = vmatpush.bf16.msra.mxu0 %v131
  %209 = vmatpush.bf16.msra.mxu0 %v129
  %210 = vmatmul.bf16.gmra.mxu0 %v155
  %v211 = vpop.f32.mrf.mxu0
  %v212 = vadd.f32 %v89, %v211
  %v213 = vpop.f32.mrf.mxu0
  %v214 = vadd.f32 %v89, %v213
  %215 = vmatmul.bf16.gmra.mxu0 %v158
  %v216 = vpop.f32.mrf.mxu0
  %v217 = vadd.f32 %v89, %v216
  %v218 = vpop.f32.mrf.mxu0
  %v219 = vadd.f32 %v89, %v218
  %220 = vmatmul.bf16.gmra.mxu0 %v161
  %v221 = vpop.f32.mrf.mxu0
  %v222 = vadd.f32 %v89, %v221
  %v223 = vpop.f32.mrf.mxu0
  %v224 = vadd.f32 %v89, %v223
  %225 = vmatmul.bf16.gmra.mxu0 %v164
  %v226 = vpop.f32.mrf.mxu0
  %v227 = vadd.f32 %v89, %v226
  %v228 = vpop.f32.mrf.mxu0
  %v229 = vadd.f32 %v89, %v228
  %230 = vmatmul.bf16.gmra.mxu0 %v167
  %v231 = vpop.f32.mrf.mxu0
  %v232 = vadd.f32 %v89, %v231
  %v233 = vpop.f32.mrf.mxu0
  %v234 = vadd.f32 %v89, %v233
  %235 = vmatmul.bf16.gmra.mxu0 %v170
  %v236 = vpop.f32.mrf.mxu0
  %v237 = vadd.f32 %v89, %v236
  %v238 = vpop.f32.mrf.mxu0
  %v239 = vadd.f32 %v89, %v238
  %240 = vmatmul.bf16.gmra.mxu0 %v173
  %v241 = vpop.f32.mrf.mxu0
  %v242 = vadd.f32 %v89, %v241
  %v243 = vpop.f32.mrf.mxu0
  %v244 = vadd.f32 %v89, %v243
  %245 = vmatmul.bf16.gmra.mxu0 %v176
  %v246 = vpop.f32.mrf.mxu0
  %v247 = vadd.f32 %v89, %v246
  %v248 = vpop.f32.mrf.mxu0
  %v249 = vadd.f32 %v89, %v248
  %250 = vmatmul.bf16.gmra.mxu0 %v179
  %v251 = vpop.f32.mrf.mxu0
  %v252 = vadd.f32 %v89, %v251
  %v253 = vpop.f32.mrf.mxu0
  %v254 = vadd.f32 %v89, %v253
  %255 = vmatmul.bf16.gmra.mxu0 %v182
  %v256 = vpop.f32.mrf.mxu0
  %v257 = vadd.f32 %v89, %v256
  %v258 = vpop.f32.mrf.mxu0
  %v259 = vadd.f32 %v89, %v258
  %260 = vmatmul.bf16.gmra.mxu0 %v185
  %v261 = vpop.f32.mrf.mxu0
  %v262 = vadd.f32 %v89, %v261
  %v263 = vpop.f32.mrf.mxu0
  %v264 = vadd.f32 %v89, %v263
  %265 = vmatmul.bf16.gmra.mxu0 %v188
  %v266 = vpop.f32.mrf.mxu0
  %v267 = vadd.f32 %v89, %v266
  %v268 = vpop.f32.mrf.mxu0
  %v269 = vadd.f32 %v89, %v268
  %270 = vmatmul.bf16.gmra.mxu0 %v191
  %v271 = vpop.f32.mrf.mxu0
  %v272 = vadd.f32 %v89, %v271
  %v273 = vpop.f32.mrf.mxu0
  %v274 = vadd.f32 %v89, %v273
  %275 = vmatmul.bf16.gmra.mxu0 %v194
  %v276 = vpop.f32.mrf.mxu0
  %v277 = vadd.f32 %v89, %v276
  %v278 = vpop.f32.mrf.mxu0
  %v279 = vadd.f32 %v89, %v278
  %280 = vmatmul.bf16.gmra.mxu0 %v197
  %v281 = vpop.f32.mrf.mxu0
  %v282 = vadd.f32 %v89, %v281
  %v283 = vpop.f32.mrf.mxu0
  %v284 = vadd.f32 %v89, %v283
  %285 = vmatmul.bf16.gmra.mxu0 %v200
  %v286 = vpop.f32.mrf.mxu0
  %v287 = vadd.f32 %v89, %v286
  %v288 = vpop.f32.mrf.mxu0
  %v289 = vadd.f32 %v89, %v288
  %290 = vdwg.mxu0
  %291 = vmatpush.bf16.msra.mxu0 0
  %292 = vmatpush.bf16.msra.mxu0 0
  %293 = vmatpush.bf16.msra.mxu0 %v140
  %294 = vmatpush.bf16.msra.mxu0 %v138
  %295 = vmatpush.bf16.msra.mxu0 %v136
  %296 = vmatpush.bf16.msra.mxu0 %v134
  %297 = vmatpush.bf16.msra.mxu0 %v132
  %298 = vmatpush.bf16.msra.mxu0 %v130
  %299 = vmatmul.bf16.gmra.mxu0 %v155
  %v300 = vpop.f32.mrf.mxu0
  %v301 = vadd.f32 %v90, %v300
  %v302 = vpop.f32.mrf.mxu0
  %v303 = vadd.f32 %v90, %v302
  %304 = vmatmul.bf16.gmra.mxu0 %v158
  %v305 = vpop.f32.mrf.mxu0
  %v306 = vadd.f32 %v90, %v305
  %v307 = vpop.f32.mrf.mxu0
  %v308 = vadd.f32 %v90, %v307
  %309 = vmatmul.bf16.gmra.mxu0 %v161
  %v310 = vpop.f32.mrf.mxu0
  %v311 = vadd.f32 %v90, %v310
  %v312 = vpop.f32.mrf.mxu0
  %v313 = vadd.f32 %v90, %v312
  %314 = vmatmul.bf16.gmra.mxu0 %v164
  %v315 = vpop.f32.mrf.mxu0
  %v316 = vadd.f32 %v90, %v315
  %v317 = vpop.f32.mrf.mxu0
  %v318 = vadd.f32 %v90, %v317
  %319 = vmatmul.bf16.gmra.mxu0 %v167
  %v320 = vpop.f32.mrf.mxu0
  %v321 = vadd.f32 %v90, %v320
  %v322 = vpop.f32.mrf.mxu0
  %v323 = vadd.f32 %v90, %v322
  %324 = vmatmul.bf16.gmra.mxu0 %v170
  %v325 = vpop.f32.mrf.mxu0
  %v326 = vadd.f32 %v90, %v325
  %v327 = vpop.f32.mrf.mxu0
  %v328 = vadd.f32 %v90, %v327
  %329 = vmatmul.bf16.gmra.mxu0 %v173
  %v330 = vpop.f32.mrf.mxu0
  %v331 = vadd.f32 %v90, %v330
  %v332 = vpop.f32.mrf.mxu0
  %v333 = vadd.f32 %v90, %v332
  %334 = vmatmul.bf16.gmra.mxu0 %v176
  %v335 = vpop.f32.mrf.mxu0
  %v336 = vadd.f32 %v90, %v335
  %v337 = vpop.f32.mrf.mxu0
  %v338 = vadd.f32 %v90, %v337
  %339 = vmatmul.bf16.gmra.mxu0 %v179
  %v340 = vpop.f32.mrf.mxu0
  %v341 = vadd.f32 %v90, %v340
  %v342 = vpop.f32.mrf.mxu0
  %v343 = vadd.f32 %v90, %v342
  %344 = vmatmul.bf16.gmra.mxu0 %v182
  %v345 = vpop.f32.mrf.mxu0
  %v346 = vadd.f32 %v90, %v345
  %v347 = vpop.f32.mrf.mxu0
  %v348 = vadd.f32 %v90, %v347
  %349 = vmatmul.bf16.gmra.mxu0 %v185
  %v350 = vpop.f32.mrf.mxu0
  %v351 = vadd.f32 %v90, %v350
  %v352 = vpop.f32.mrf.mxu0
  %v353 = vadd.f32 %v90, %v352
  %354 = vmatmul.bf16.gmra.mxu0 %v188
  %v355 = vpop.f32.mrf.mxu0
  %v356 = vadd.f32 %v90, %v355
  %v357 = vpop.f32.mrf.mxu0
  %v358 = vadd.f32 %v90, %v357
  %359 = vmatmul.bf16.gmra.mxu0 %v191
  %v360 = vpop.f32.mrf.mxu0
  %v361 = vadd.f32 %v90, %v360
  %v362 = vpop.f32.mrf.mxu0
  %v363 = vadd.f32 %v90, %v362
  %364 = vmatmul.bf16.gmra.mxu0 %v194
  %v365 = vpop.f32.mrf.mxu0
  %v366 = vadd.f32 %v90, %v365
  %v367 = vpop.f32.mrf.mxu0
  %v368 = vadd.f32 %v90, %v367
  %369 = vmatmul.bf16.gmra.mxu0 %v197
  %v370 = vpop.f32.mrf.mxu0
  %v371 = vadd.f32 %v90, %v370
  %v372 = vpop.f32.mrf.mxu0
  %v373 = vadd.f32 %v90, %v372
  %374 = vmatmul.bf16.gmra.mxu0 %v200
  %v375 = vpop.f32.mrf.mxu0
  %v376 = vadd.f32 %v90, %v375
  %v377 = vpop.f32.mrf.mxu0
  %v378 = vadd.f32 %v90, %v377
  %379 = vdwg.mxu0
  %380 = vst [vmem:[%s7] sm:$0xff] %v301
  %381 = vst [vmem:[%s7 + $0x8] sm:$0xff] %v303
  %382 = vst [vmem:[%s7 + $0x10] sm:$0xff] %v306
  %383 = vst [vmem:[%s7 + $0x18] sm:$0xff] %v308
  %384 = vst [vmem:[%s7 + $0x20] sm:$0xff] %v311
  %385 = vst [vmem:[%s7 + $0x28] sm:$0xff] %v313
  %386 = vst [vmem:[%s7 + $0x30] sm:$0xff] %v316
  %387 = vst [vmem:[%s7 + $0x38] sm:$0xff] %v318
  %388 = vst [vmem:[%s7 + $0x40] sm:$0xff] %v321
  %389 = vst [vmem:[%s7 + $0x48] sm:$0xff] %v323
  %390 = vst [vmem:[%s7 + $0x50] sm:$0xff] %v326
  %391 = vst [vmem:[%s7 + $0x58] sm:$0xff] %v328
  %392 = vst [vmem:[%s7 + $0x60] sm:$0xff] %v331
  %393 = vst [vmem:[%s7 + $0x68] sm:$0xff] %v333
  %394 = vst [vmem:[%s7 + $0x70] sm:$0xff] %v336
  %395 = vst [vmem:[%s7 + $0x78] sm:$0xff] %v338
  %396 = vst [vmem:[%s7 + $0x80] sm:$0xff] %v341
  %397 = vst [vmem:[%s7 + $0x88] sm:$0xff] %v343
  %398 = vst [vmem:[%s7 + $0x90] sm:$0xff] %v346
  %399 = vst [vmem:[%s7 + $0x98] sm:$0xff] %v348
  %400 = vst [vmem:[%s7 + $0xa0] sm:$0xff] %v351
  %401 = vst [vmem:[%s7 + $0xa8] sm:$0xff] %v353
  %402 = vst [vmem:[%s7 + $0xb0] sm:$0xff] %v356
  %403 = vst [vmem:[%s7 + $0xb8] sm:$0xff] %v358
  %404 = vst [vmem:[%s7 + $0xc0] sm:$0xff] %v361
  %405 = vst [vmem:[%s7 + $0xc8] sm:$0xff] %v363
  %406 = vst [vmem:[%s7 + $0xd0] sm:$0xff] %v366
  %407 = vst [vmem:[%s7 + $0xd8] sm:$0xff] %v368
  %408 = vst [vmem:[%s7 + $0xe0] sm:$0xff] %v371
  %409 = vst [vmem:[%s7 + $0xe8] sm:$0xff] %v373
  %410 = vst [vmem:[%s7 + $0xf0] sm:$0xff] %v376
  %411 = vst [vmem:[%s7 + $0xf8] sm:$0xff] %v378
  %v412 = vmax.f32 %v212, 0.0
  %v413 = vmax.f32 %v214, 0.0
  %v414 = vmax.f32 %v217, 0.0
  %v415 = vmax.f32 %v219, 0.0
  %v416 = vmax.f32 %v222, 0.0
  %v417 = vmax.f32 %v224, 0.0
  %v418 = vmax.f32 %v227, 0.0
  %v419 = vmax.f32 %v229, 0.0
  %v420 = vmax.f32 %v232, 0.0
  %v421 = vmax.f32 %v234, 0.0
  %v422 = vmax.f32 %v237, 0.0
  %v423 = vmax.f32 %v239, 0.0
  %v424 = vmax.f32 %v242, 0.0
  %v425 = vmax.f32 %v244, 0.0
  %v426 = vmax.f32 %v247, 0.0
  %v427 = vmax.f32 %v249, 0.0
  %v428 = vmax.f32 %v252, 0.0
  %v429 = vmax.f32 %v254, 0.0
  %v430 = vmax.f32 %v257, 0.0
  %v431 = vmax.f32 %v259, 0.0
  %v432 = vmax.f32 %v262, 0.0
  %v433 = vmax.f32 %v264, 0.0
  %v434 = vmax.f32 %v267, 0.0
  %v435 = vmax.f32 %v269, 0.0
  %v436 = vmax.f32 %v272, 0.0
  %v437 = vmax.f32 %v274, 0.0
  %v438 = vmax.f32 %v277, 0.0
  %v439 = vmax.f32 %v279, 0.0
  %v440 = vmax.f32 %v282, 0.0
  %v441 = vmax.f32 %v284, 0.0
  %v442 = vmax.f32 %v287, 0.0
  %v443 = vmax.f32 %v289, 0.0
  %v444 = vpack.c.bf16 %v413, %v412
  %v445 = vpack.c.bf16 %v415, %v414
  %v446 = vpack.c.bf16 %v417, %v416
  %v447 = vpack.c.bf16 %v419, %v418
  %v448 = vpack.c.bf16 %v421, %v420
  %v449 = vpack.c.bf16 %v423, %v422
  %v450 = vpack.c.bf16 %v425, %v424
  %v451 = vpack.c.bf16 %v427, %v426
  %v452 = vpack.c.bf16 %v429, %v428
  %v453 = vpack.c.bf16 %v431, %v430
  %v454 = vpack.c.bf16 %v433, %v432
  %v455 = vpack.c.bf16 %v435, %v434
  %v456 = vpack.c.bf16 %v437, %v436
  %v457 = vpack.c.bf16 %v439, %v438
  %v458 = vpack.c.bf16 %v441, %v440
  %v459 = vpack.c.bf16 %v443, %v442
  %v460 = vld [vmem:[%s3] sm:$0xf]
  %v461 = vld [vmem:[%s3 + $0x4] sm:$0xf]
  %v462 = vld [vmem:[%s3 + $0x8] sm:$0xf]
  %v463 = vld [vmem:[%s3 + $0xc] sm:$0xf]
  %v464 = vld [vmem:[%s3 + $0x10] sm:$0xf]
  %v465 = vld [vmem:[%s3 + $0x14] sm:$0xf]
  %v466 = vld [vmem:[%s3 + $0x18] sm:$0xf]
  %v467 = vld [vmem:[%s3 + $0x1c] sm:$0xf]
  %v468 = vld [vmem:[%s3 + $0x20] sm:$0xf]
  %v469 = vld [vmem:[%s3 + $0x24] sm:$0xf]
  %v470 = vld [vmem:[%s3 + $0x28] sm:$0xf]
  %v471 = vld [vmem:[%s3 + $0x2c] sm:$0xf]
  %v472 = vld [vmem:[%s3 + $0x30] sm:$0xf]
  %v473 = vld [vmem:[%s3 + $0x34] sm:$0xf]
  %v474 = vld [vmem:[%s3 + $0x38] sm:$0xf]
  %v475 = vld [vmem:[%s3 + $0x3c] sm:$0xf]
  %v476 = vld [vmem:[%s4] sm:$0x1]
  %v478 = vperm.slane %v476, 0
  %v496 = vunpack.c.l.b16 %v460
  %v497 = vunpack.c.l.b16 %v461
  %v498 = vunpack.c.l.b16 %v462
  %v499 = vunpack.c.l.b16 %v463
  %v500 = vunpack.c.l.b16 %v464
  %v501 = vunpack.c.l.b16 %v465
  %v502 = vunpack.c.l.b16 %v466
  %v503 = vunpack.c.l.b16 %v467
  %v504 = vunpack.c.l.b16 %v468
  %v505 = vunpack.c.l.b16 %v469
  %v506 = vunpack.c.l.b16 %v470
  %v507 = vunpack.c.l.b16 %v471
  %v508 = vunpack.c.l.b16 %v472
  %v509 = vunpack.c.l.b16 %v473
  %v510 = vunpack.c.l.b16 %v474
  %v511 = vunpack.c.l.b16 %v475
  %v512 = vpack.c.b16 %v497, %v496
  %v513 = vpack.c.b16 %v499, %v498
  %v514 = vpack.c.b16 %v501, %v500
  %v515 = vpack.c.b16 %v503, %v502
  %v516 = vpack.c.b16 %v505, %v504
  %v517 = vpack.c.b16 %v507, %v506
  %v518 = vpack.c.b16 %v509, %v508
  %v519 = vpack.c.b16 %v511, %v510
  %528 = vmatpush.bf16.msra.mxu0 %v519
  %529 = vmatpush.bf16.msra.mxu0 %v518
  %530 = vmatpush.bf16.msra.mxu0 %v517
  %531 = vmatpush.bf16.msra.mxu0 %v516
  %532 = vmatpush.bf16.msra.mxu0 %v515
  %533 = vmatpush.bf16.msra.mxu0 %v514
  %534 = vmatpush.bf16.msra.mxu0 %v513
  %535 = vmatpush.bf16.msra.mxu0 %v512
  %536 = vmatmul.bf16.gmra.mxu0 %v444
  %v537 = vpop.f32.mrf.mxu0
  %v538 = vadd.f32 %v478, %v537
  %v539 = vpop.f32.mrf.mxu0
  %v540 = vadd.f32 %v478, %v539
  %541 = vmatmul.bf16.gmra.mxu0 %v445
  %v542 = vpop.f32.mrf.mxu0
  %v543 = vadd.f32 %v478, %v542
  %v544 = vpop.f32.mrf.mxu0
  %v545 = vadd.f32 %v478, %v544
  %546 = vmatmul.bf16.gmra.mxu0 %v446
  %v547 = vpop.f32.mrf.mxu0
  %v548 = vadd.f32 %v478, %v547
  %v549 = vpop.f32.mrf.mxu0
  %v550 = vadd.f32 %v478, %v549
  %551 = vmatmul.bf16.gmra.mxu0 %v447
  %v552 = vpop.f32.mrf.mxu0
  %v553 = vadd.f32 %v478, %v552
  %v554 = vpop.f32.mrf.mxu0
  %v555 = vadd.f32 %v478, %v554
  %556 = vmatmul.bf16.gmra.mxu0 %v448
  %v557 = vpop.f32.mrf.mxu0
  %v558 = vadd.f32 %v478, %v557
  %v559 = vpop.f32.mrf.mxu0
  %v560 = vadd.f32 %v478, %v559
  %561 = vmatmul.bf16.gmra.mxu0 %v449
  %v562 = vpop.f32.mrf.mxu0
  %v563 = vadd.f32 %v478, %v562
  %v564 = vpop.f32.mrf.mxu0
  %v565 = vadd.f32 %v478, %v564
  %566 = vmatmul.bf16.gmra.mxu0 %v450
  %v567 = vpop.f32.mrf.mxu0
  %v568 = vadd.f32 %v478, %v567
  %v569 = vpop.f32.mrf.mxu0
  %v570 = vadd.f32 %v478, %v569
  %571 = vmatmul.bf16.gmra.mxu0 %v451
  %v572 = vpop.f32.mrf.mxu0
  %v573 = vadd.f32 %v478, %v572
  %v574 = vpop.f32.mrf.mxu0
  %v575 = vadd.f32 %v478, %v574
  %576 = vmatmul.bf16.gmra.mxu0 %v452
  %v577 = vpop.f32.mrf.mxu0
  %v578 = vadd.f32 %v478, %v577
  %v579 = vpop.f32.mrf.mxu0
  %v580 = vadd.f32 %v478, %v579
  %581 = vmatmul.bf16.gmra.mxu0 %v453
  %v582 = vpop.f32.mrf.mxu0
  %v583 = vadd.f32 %v478, %v582
  %v584 = vpop.f32.mrf.mxu0
  %v585 = vadd.f32 %v478, %v584
  %586 = vmatmul.bf16.gmra.mxu0 %v454
  %v587 = vpop.f32.mrf.mxu0
  %v588 = vadd.f32 %v478, %v587
  %v589 = vpop.f32.mrf.mxu0
  %v590 = vadd.f32 %v478, %v589
  %591 = vmatmul.bf16.gmra.mxu0 %v455
  %v592 = vpop.f32.mrf.mxu0
  %v593 = vadd.f32 %v478, %v592
  %v594 = vpop.f32.mrf.mxu0
  %v595 = vadd.f32 %v478, %v594
  %596 = vmatmul.bf16.gmra.mxu0 %v456
  %v597 = vpop.f32.mrf.mxu0
  %v598 = vadd.f32 %v478, %v597
  %v599 = vpop.f32.mrf.mxu0
  %v600 = vadd.f32 %v478, %v599
  %601 = vmatmul.bf16.gmra.mxu0 %v457
  %v602 = vpop.f32.mrf.mxu0
  %v603 = vadd.f32 %v478, %v602
  %v604 = vpop.f32.mrf.mxu0
  %v605 = vadd.f32 %v478, %v604
  %606 = vmatmul.bf16.gmra.mxu0 %v458
  %v607 = vpop.f32.mrf.mxu0
  %v608 = vadd.f32 %v478, %v607
  %v609 = vpop.f32.mrf.mxu0
  %v610 = vadd.f32 %v478, %v609
  %611 = vmatmul.bf16.gmra.mxu0 %v459
  %v612 = vpop.f32.mrf.mxu0
  %v613 = vadd.f32 %v478, %v612
  %v614 = vpop.f32.mrf.mxu0
  %v615 = vadd.f32 %v478, %v614
  %616 = vdwg.mxu0
  %v617 = vmax.f32 %v538, 0.0
  %v618 = vmax.f32 %v540, 0.0
  %v619 = vmax.f32 %v543, 0.0
  %v620 = vmax.f32 %v545, 0.0
  %v621 = vmax.f32 %v548, 0.0
  %v622 = vmax.f32 %v550, 0.0
  %v623 = vmax.f32 %v553, 0.0
  %v624 = vmax.f32 %v555, 0.0
  %v625 = vmax.f32 %v558, 0.0
  %v626 = vmax.f32 %v560, 0.0
  %v627 = vmax.f32 %v563, 0.0
  %v628 = vmax.f32 %v565, 0.0
  %v629 = vmax.f32 %v568, 0.0
  %v630 = vmax.f32 %v570, 0.0
  %v631 = vmax.f32 %v573, 0.0
  %v632 = vmax.f32 %v575, 0.0
  %v633 = vmax.f32 %v578, 0.0
  %v634 = vmax.f32 %v580, 0.0
  %v635 = vmax.f32 %v583, 0.0
  %v636 = vmax.f32 %v585, 0.0
  %v637 = vmax.f32 %v588, 0.0
  %v638 = vmax.f32 %v590, 0.0
  %v639 = vmax.f32 %v593, 0.0
  %v640 = vmax.f32 %v595, 0.0
  %v641 = vmax.f32 %v598, 0.0
  %v642 = vmax.f32 %v600, 0.0
  %v643 = vmax.f32 %v603, 0.0
  %v644 = vmax.f32 %v605, 0.0
  %v645 = vmax.f32 %v608, 0.0
  %v646 = vmax.f32 %v610, 0.0
  %v647 = vmax.f32 %v613, 0.0
  %v648 = vmax.f32 %v615, 0.0
  %v649 = vpack.c.bf16 %v618, %v617
  %v650 = vpack.c.bf16 %v620, %v619
  %v651 = vpack.c.bf16 %v622, %v621
  %v652 = vpack.c.bf16 %v624, %v623
  %v653 = vpack.c.bf16 %v626, %v625
  %v654 = vpack.c.bf16 %v628, %v627
  %v655 = vpack.c.bf16 %v630, %v629
  %v656 = vpack.c.bf16 %v632, %v631
  %v657 = vpack.c.bf16 %v634, %v633
  %v658 = vpack.c.bf16 %v636, %v635
  %v659 = vpack.c.bf16 %v638, %v637
  %v660 = vpack.c.bf16 %v640, %v639
  %v661 = vpack.c.bf16 %v642, %v641
  %v662 = vpack.c.bf16 %v644, %v643
  %v663 = vpack.c.bf16 %v646, %v645
  %v664 = vpack.c.bf16 %v648, %v647
  %v665 = vld [vmem:[%s5] sm:$0xf]
  %v666 = vld [vmem:[%s5 + $0x4] sm:$0xf]
  %v667 = vld [vmem:[%s5 + $0x8] sm:$0xf]
  %v668 = vld [vmem:[%s5 + $0xc] sm:$0xf]
  %v669 = vld [vmem:[%s5 + $0x10] sm:$0xf]
  %v670 = vld [vmem:[%s5 + $0x14] sm:$0xf]
  %v671 = vld [vmem:[%s5 + $0x18] sm:$0xf]
  %v672 = vld [vmem:[%s5 + $0x1c] sm:$0xf]
  %v673 = vld [vmem:[%s5 + $0x20] sm:$0xf]
  %v674 = vld [vmem:[%s5 + $0x24] sm:$0xf]
  %v675 = vld [vmem:[%s5 + $0x28] sm:$0xf]
  %v676 = vld [vmem:[%s5 + $0x2c] sm:$0xf]
  %v677 = vld [vmem:[%s5 + $0x30] sm:$0xf]
  %v678 = vld [vmem:[%s5 + $0x34] sm:$0xf]
  %v679 = vld [vmem:[%s5 + $0x38] sm:$0xf]
  %v680 = vld [vmem:[%s5 + $0x3c] sm:$0xf]
  %v681 = vld [vmem:[%s6] sm:$0x1]
  %v683 = vperm.slane %v681, 0
  %v701 = vunpack.c.l.b16 %v665
  %v702 = vunpack.c.l.b16 %v666
  %v703 = vunpack.c.l.b16 %v667
  %v704 = vunpack.c.l.b16 %v668
  %v705 = vunpack.c.l.b16 %v669
  %v706 = vunpack.c.l.b16 %v670
  %v707 = vunpack.c.l.b16 %v671
  %v708 = vunpack.c.l.b16 %v672
  %v709 = vunpack.c.l.b16 %v673
  %v710 = vunpack.c.l.b16 %v674
  %v711 = vunpack.c.l.b16 %v675
  %v712 = vunpack.c.l.b16 %v676
  %v713 = vunpack.c.l.b16 %v677
  %v714 = vunpack.c.l.b16 %v678
  %v715 = vunpack.c.l.b16 %v679
  %v716 = vunpack.c.l.b16 %v680
  %v717 = vpack.c.b16 %v702, %v701
  %v718 = vpack.c.b16 %v704, %v703
  %v719 = vpack.c.b16 %v706, %v705
  %v720 = vpack.c.b16 %v708, %v707
  %v721 = vpack.c.b16 %v710, %v709
  %v722 = vpack.c.b16 %v712, %v711
  %v723 = vpack.c.b16 %v714, %v713
  %v724 = vpack.c.b16 %v716, %v715
  %733 = vmatpush.bf16.msra.mxu0 %v724
  %734 = vmatpush.bf16.msra.mxu0 %v723
  %735 = vmatpush.bf16.msra.mxu0 %v722
  %736 = vmatpush.bf16.msra.mxu0 %v721
  %737 = vmatpush.bf16.msra.mxu0 %v720
  %738 = vmatpush.bf16.msra.mxu0 %v719
  %739 = vmatpush.bf16.msra.mxu0 %v718
  %740 = vmatpush.bf16.msra.mxu0 %v717
  %741 = vmatmul.bf16.gmra.mxu0 %v649
  %v742 = vpop.f32.mrf.mxu0
  %v743 = vadd.f32 %v683, %v742
  %v744 = vpop.f32.mrf.mxu0
  %v745 = vadd.f32 %v683, %v744
  %746 = vmatmul.bf16.gmra.mxu0 %v650
  %v747 = vpop.f32.mrf.mxu0
  %v748 = vadd.f32 %v683, %v747
  %v749 = vpop.f32.mrf.mxu0
  %v750 = vadd.f32 %v683, %v749
  %751 = vmatmul.bf16.gmra.mxu0 %v651
  %v752 = vpop.f32.mrf.mxu0
  %v753 = vadd.f32 %v683, %v752
  %v754 = vpop.f32.mrf.mxu0
  %v755 = vadd.f32 %v683, %v754
  %756 = vmatmul.bf16.gmra.mxu0 %v652
  %v757 = vpop.f32.mrf.mxu0
  %v758 = vadd.f32 %v683, %v757
  %v759 = vpop.f32.mrf.mxu0
  %v760 = vadd.f32 %v683, %v759
  %761 = vmatmul.bf16.gmra.mxu0 %v653
  %v762 = vpop.f32.mrf.mxu0
  %v763 = vadd.f32 %v683, %v762
  %v764 = vpop.f32.mrf.mxu0
  %v765 = vadd.f32 %v683, %v764
  %766 = vmatmul.bf16.gmra.mxu0 %v654
  %v767 = vpop.f32.mrf.mxu0
  %v768 = vadd.f32 %v683, %v767
  %v769 = vpop.f32.mrf.mxu0
  %v770 = vadd.f32 %v683, %v769
  %771 = vmatmul.bf16.gmra.mxu0 %v655
  %v772 = vpop.f32.mrf.mxu0
  %v773 = vadd.f32 %v683, %v772
  %v774 = vpop.f32.mrf.mxu0
  %v775 = vadd.f32 %v683, %v774
  %776 = vmatmul.bf16.gmra.mxu0 %v656
  %v777 = vpop.f32.mrf.mxu0
  %v778 = vadd.f32 %v683, %v777
  %v779 = vpop.f32.mrf.mxu0
  %v780 = vadd.f32 %v683, %v779
  %781 = vmatmul.bf16.gmra.mxu0 %v657
  %v782 = vpop.f32.mrf.mxu0
  %v783 = vadd.f32 %v683, %v782
  %v784 = vpop.f32.mrf.mxu0
  %v785 = vadd.f32 %v683, %v784
  %786 = vmatmul.bf16.gmra.mxu0 %v658
  %v787 = vpop.f32.mrf.mxu0
  %v788 = vadd.f32 %v683, %v787
  %v789 = vpop.f32.mrf.mxu0
  %v790 = vadd.f32 %v683, %v789
  %791 = vmatmul.bf16.gmra.mxu0 %v659
  %v792 = vpop.f32.mrf.mxu0
  %v793 = vadd.f32 %v683, %v792
  %v794 = vpop.f32.mrf.mxu0
  %v795 = vadd.f32 %v683, %v794
  %796 = vmatmul.bf16.gmra.mxu0 %v660
  %v797 = vpop.f32.mrf.mxu0
  %v798 = vadd.f32 %v683, %v797
  %v799 = vpop.f32.mrf.mxu0
  %v800 = vadd.f32 %v683, %v799
  %801 = vmatmul.bf16.gmra.mxu0 %v661
  %v802 = vpop.f32.mrf.mxu0
  %v803 = vadd.f32 %v683, %v802
  %v804 = vpop.f32.mrf.mxu0
  %v805 = vadd.f32 %v683, %v804
  %806 = vmatmul.bf16.gmra.mxu0 %v662
  %v807 = vpop.f32.mrf.mxu0
  %v808 = vadd.f32 %v683, %v807
  %v809 = vpop.f32.mrf.mxu0
  %v810 = vadd.f32 %v683, %v809
  %811 = vmatmul.bf16.gmra.mxu0 %v663
  %v812 = vpop.f32.mrf.mxu0
  %v813 = vadd.f32 %v683, %v812
  %v814 = vpop.f32.mrf.mxu0
  %v815 = vadd.f32 %v683, %v814
  %816 = vmatmul.bf16.gmra.mxu0 %v664
  %v817 = vpop.f32.mrf.mxu0
  %v818 = vadd.f32 %v683, %v817
  %v819 = vpop.f32.mrf.mxu0
  %v820 = vadd.f32 %v683, %v819
  %821 = vdwg.mxu0
  %v822 = vmax.f32 %v743, 0.0
  %v823 = vmax.f32 %v745, 0.0
  %v824 = vmax.f32 %v748, 0.0
  %v825 = vmax.f32 %v750, 0.0
  %v826 = vmax.f32 %v753, 0.0
  %v827 = vmax.f32 %v755, 0.0
  %v828 = vmax.f32 %v758, 0.0
  %v829 = vmax.f32 %v760, 0.0
  %v830 = vmax.f32 %v763, 0.0
  %v831 = vmax.f32 %v765, 0.0
  %v832 = vmax.f32 %v768, 0.0
  %v833 = vmax.f32 %v770, 0.0
  %v834 = vmax.f32 %v773, 0.0
  %v835 = vmax.f32 %v775, 0.0
  %v836 = vmax.f32 %v778, 0.0
  %v837 = vmax.f32 %v780, 0.0
  %v838 = vmax.f32 %v783, 0.0
  %v839 = vmax.f32 %v785, 0.0
  %v840 = vmax.f32 %v788, 0.0
  %v841 = vmax.f32 %v790, 0.0
  %v842 = vmax.f32 %v793, 0.0
  %v843 = vmax.f32 %v795, 0.0
  %v844 = vmax.f32 %v798, 0.0
  %v845 = vmax.f32 %v800, 0.0
  %v846 = vmax.f32 %v803, 0.0
  %v847 = vmax.f32 %v805, 0.0
  %v848 = vmax.f32 %v808, 0.0
  %v849 = vmax.f32 %v810, 0.0
  %v850 = vmax.f32 %v813, 0.0
  %v851 = vmax.f32 %v815, 0.0
  %v852 = vmax.f32 %v818, 0.0
  %v853 = vmax.f32 %v820, 0.0
  %v854 = vld [vmem:[%s7] sm:$0xff]
  %v855 = vld [vmem:[%s7 + $0x8] sm:$0xff]
  %v856 = vld [vmem:[%s7 + $0x10] sm:$0xff]
  %v857 = vld [vmem:[%s7 + $0x18] sm:$0xff]
  %v858 = vld [vmem:[%s7 + $0x20] sm:$0xff]
  %v859 = vld [vmem:[%s7 + $0x28] sm:$0xff]
  %v860 = vld [vmem:[%s7 + $0x30] sm:$0xff]
  %v861 = vld [vmem:[%s7 + $0x38] sm:$0xff]
  %v862 = vld [vmem:[%s7 + $0x40] sm:$0xff]
  %v863 = vld [vmem:[%s7 + $0x48] sm:$0xff]
  %v864 = vld [vmem:[%s7 + $0x50] sm:$0xff]
  %v865 = vld [vmem:[%s7 + $0x58] sm:$0xff]
  %v866 = vld [vmem:[%s7 + $0x60] sm:$0xff]
  %v867 = vld [vmem:[%s7 + $0x68] sm:$0xff]
  %v868 = vld [vmem:[%s7 + $0x70] sm:$0xff]
  %v869 = vld [vmem:[%s7 + $0x78] sm:$0xff]
  %v870 = vld [vmem:[%s7 + $0x80] sm:$0xff]
  %v871 = vld [vmem:[%s7 + $0x88] sm:$0xff]
  %v872 = vld [vmem:[%s7 + $0x90] sm:$0xff]
  %v873 = vld [vmem:[%s7 + $0x98] sm:$0xff]
  %v874 = vld [vmem:[%s7 + $0xa0] sm:$0xff]
  %v875 = vld [vmem:[%s7 + $0xa8] sm:$0xff]
  %v876 = vld [vmem:[%s7 + $0xb0] sm:$0xff]
  %v877 = vld [vmem:[%s7 + $0xb8] sm:$0xff]
  %v878 = vld [vmem:[%s7 + $0xc0] sm:$0xff]
  %v879 = vld [vmem:[%s7 + $0xc8] sm:$0xff]
  %v880 = vld [vmem:[%s7 + $0xd0] sm:$0xff]
  %v881 = vld [vmem:[%s7 + $0xd8] sm:$0xff]
  %v882 = vld [vmem:[%s7 + $0xe0] sm:$0xff]
  %v883 = vld [vmem:[%s7 + $0xe8] sm:$0xff]
  %v884 = vld [vmem:[%s7 + $0xf0] sm:$0xff]
  %v885 = vld [vmem:[%s7 + $0xf8] sm:$0xff]
  %v886 = vadd.f32 %v822, %v854
  %v887 = vadd.f32 %v823, %v855
  %v888 = vadd.f32 %v824, %v856
  %v889 = vadd.f32 %v825, %v857
  %v890 = vadd.f32 %v826, %v858
  %v891 = vadd.f32 %v827, %v859
  %v892 = vadd.f32 %v828, %v860
  %v893 = vadd.f32 %v829, %v861
  %v894 = vadd.f32 %v830, %v862
  %v895 = vadd.f32 %v831, %v863
  %v896 = vadd.f32 %v832, %v864
  %v897 = vadd.f32 %v833, %v865
  %v898 = vadd.f32 %v834, %v866
  %v899 = vadd.f32 %v835, %v867
  %v900 = vadd.f32 %v836, %v868
  %v901 = vadd.f32 %v837, %v869
  %v902 = vadd.f32 %v838, %v870
  %v903 = vadd.f32 %v839, %v871
  %v904 = vadd.f32 %v840, %v872
  %v905 = vadd.f32 %v841, %v873
  %v906 = vadd.f32 %v842, %v874
  %v907 = vadd.f32 %v843, %v875
  %v908 = vadd.f32 %v844, %v876
  %v909 = vadd.f32 %v845, %v877
  %v910 = vadd.f32 %v846, %v878
  %v911 = vadd.f32 %v847, %v879
  %v912 = vadd.f32 %v848, %v880
  %v913 = vadd.f32 %v849, %v881
  %v914 = vadd.f32 %v850, %v882
  %v915 = vadd.f32 %v851, %v883
  %v916 = vadd.f32 %v852, %v884
  %v917 = vadd.f32 %v853, %v885
  %918 = vst [vmem:[%s7] sm:$0xff] %v886
  %919 = vst [vmem:[%s7 + $0x8] sm:$0xff] %v887
  %920 = vst [vmem:[%s7 + $0x10] sm:$0xff] %v888
  %921 = vst [vmem:[%s7 + $0x18] sm:$0xff] %v889
  %922 = vst [vmem:[%s7 + $0x20] sm:$0xff] %v890
  %923 = vst [vmem:[%s7 + $0x28] sm:$0xff] %v891
  %924 = vst [vmem:[%s7 + $0x30] sm:$0xff] %v892
  %925 = vst [vmem:[%s7 + $0x38] sm:$0xff] %v893
  %926 = vst [vmem:[%s7 + $0x40] sm:$0xff] %v894
  %927 = vst [vmem:[%s7 + $0x48] sm:$0xff] %v895
  %928 = vst [vmem:[%s7 + $0x50] sm:$0xff] %v896
  %929 = vst [vmem:[%s7 + $0x58] sm:$0xff] %v897
  %930 = vst [vmem:[%s7 + $0x60] sm:$0xff] %v898
  %931 = vst [vmem:[%s7 + $0x68] sm:$0xff] %v899
  %932 = vst [vmem:[%s7 + $0x70] sm:$0xff] %v900
  %933 = vst [vmem:[%s7 + $0x78] sm:$0xff] %v901
  %934 = vst [vmem:[%s7 + $0x80] sm:$0xff] %v902
  %935 = vst [vmem:[%s7 + $0x88] sm:$0xff] %v903
  %936 = vst [vmem:[%s7 + $0x90] sm:$0xff] %v904
  %937 = vst [vmem:[%s7 + $0x98] sm:$0xff] %v905
  %938 = vst [vmem:[%s7 + $0xa0] sm:$0xff] %v906
  %939 = vst [vmem:[%s7 + $0xa8] sm:$0xff] %v907
  %940 = vst [vmem:[%s7 + $0xb0] sm:$0xff] %v908
  %941 = vst [vmem:[%s7 + $0xb8] sm:$0xff] %v909
  %942 = vst [vmem:[%s7 + $0xc0] sm:$0xff] %v910
  %943 = vst [vmem:[%s7 + $0xc8] sm:$0xff] %v911
  %944 = vst [vmem:[%s7 + $0xd0] sm:$0xff] %v912
  %945 = vst [vmem:[%s7 + $0xd8] sm:$0xff] %v913
  %946 = vst [vmem:[%s7 + $0xe0] sm:$0xff] %v914
  %947 = vst [vmem:[%s7 + $0xe8] sm:$0xff] %v915
  %948 = vst [vmem:[%s7 + $0xf0] sm:$0xff] %v916
  %949 = vst [vmem:[%s7 + $0xf8] sm:$0xff] %v917
  // Predicated region
  $region30: #{_fc_forward_impl.1} parent=0 // pred_check
    _
  $region31: #{_fc_forward_impl.1} parent=0 // pred_check_branch
    %951 = sbr.rel (0) target = $region33
  $region32: #{_fc_forward_impl.1} parent=0 // pred_region
    _
  $region33: #{_fc_forward_impl.1} parent=0 // pred_fallthru
    _
  // Predicated region
  $region34: #{_fc_forward_impl.1} parent=0 // pred_check
    _
  $region35: #{_fc_forward_impl.1} parent=0 // pred_check_branch
    %953 = sbr.rel (0) target = $region37
  $region36: #{_fc_forward_impl.1} parent=0 // pred_region
    _
  $region37: #{_fc_forward_impl.1} parent=0 // pred_fallthru
    _

</llo_original>
